<compile_context>
chip_gen: v7x
topology: tpu7x:2x2x1
jax: 0.10.0
libtpu: 0.0.40
codegen_flags: <defaults>
</compile_context>

<pallas_src>
import functools

import jax
import jax.numpy as jnp
from jax import lax
from jax.experimental import pallas as pl
from jax.experimental.pallas import tpu as pltpu

HIDDEN = 768
NUM_CLASSES = 53
CPAD = 128            # lane-padded class dimension
NEG_INF = -1e30


def _round_up(x, m):
    return (x + m - 1) // m * m


# ----------------------------------------------------------------------------
# Single fused kernel
#   grid = (row tiles of bert_pooled,)
#   step i          : batch_e[i*tm : (i+1)*tm] = tanh(x_tile) @ W_dec + b_dec
#   last step (when): per-bag scores + entity decoder + both cross-entropies
# ----------------------------------------------------------------------------
def _fused_kernel(ts_ref,                         # scalar-prefetch: bag bounds
                  x_ref, wdec_ref, bdec_ref,      # bert tile (bf16), W/b (bf16/f32)
                  ent_ref, went_ref, bent_ref,    # entity pooled, entity W/b
                  lab_ref,                        # labels [b_pad, 1] int32
                  loss_ref,                       # out [1, 1]
                  be_ref, res_ref,                # scratch: batch_e / bag scores
                  *, num_bags, max_bag, tm):
    i = pl.program_id(0)

    # --- streamed tanh + decoder matmul into resident batch_e scratch -------
    xa = jnp.tanh(x_ref[...].astype(jnp.float32)).astype(jnp.bfloat16)
    row0 = pl.multiple_of(i * tm, tm)            # full-tile-aligned store
    be_ref[pl.ds(row0, tm), :] = (
        jnp.dot(xa, wdec_ref[...], preferred_element_type=jnp.float32)
        + bdec_ref[...])

    # --- finalize on the last grid step --------------------------------------
    @pl.when(i == pl.num_programs(0) - 1)
    def _():
        # Per-bag scores.  Algebraic identity (dropout == identity):
        #   diag(Decoder(alpha @ sent_emb))[c] = sum_j alpha[c, j] * batch_e[beg+j, c]
        # with alpha[c, :] = softmax over j of batch_e[beg:end, c].
        res_ref[...] = jnp.zeros_like(res_ref)
        row_ids = lax.broadcasted_iota(jnp.int32, (max_bag, 1), 0)

        @pl.loop(0, num_bags)
        def _(b):
            beg = ts_ref[b]
            n_b = ts_ref[b + 1] - beg
            we = be_ref[pl.ds(beg, max_bag), :]            # [max_bag, CPAD]
            valid = row_ids < n_b                          # [max_bag, 1]
            we_m = jnp.where(valid, we, NEG_INF)
            mx = jnp.max(we_m, axis=0, keepdims=True)      # [1, CPAD]
            e = jnp.exp(we_m - mx)                         # padded rows -> 0
            denom = jnp.sum(e, axis=0, keepdims=True)
            num = jnp.sum(e * jnp.where(valid, we, 0.0), axis=0, keepdims=True)
            res_ref[pl.ds(b, 1), :] = num / denom          # empty bag -> 0 / max_bag

        res_bag = res_ref[...]                             # [b_pad, CPAD]

        # Entity decoder:  [b_pad, 768]bf16 @ [768, CPAD]bf16 (+f32 acc) + b
        res_ent = (jnp.dot(ent_ref[...].astype(jnp.bfloat16), went_ref[...],
                           preferred_element_type=jnp.float32)
                   + bent_ref[...])

        labels = lab_ref[...]                              # [b_pad, 1] int32
        brow_ids = lax.broadcasted_iota(jnp.int32, (labels.shape[0], 1), 0)
        row_valid = brow_ids < num_bags

        def ce_sum(logits):
            # masked cross-entropy (sum over valid rows); padded classes -> -inf
            cols = lax.broadcasted_iota(jnp.int32, logits.shape, 1)
            lg = jnp.where(cols < NUM_CLASSES, logits, NEG_INF)
            mx = jnp.max(lg, axis=1, keepdims=True)
            lse = jnp.log(jnp.sum(jnp.exp(lg - mx), axis=1, keepdims=True)) + mx
            true_logit = jnp.sum(jnp.where(cols == labels, lg, 0.0),
                                 axis=1, keepdims=True)
            per_row = jnp.where(row_valid, lse - true_logit, 0.0)
            return jnp.sum(per_row, axis=0, keepdims=True)  # [1, 1]

        loss_ref[...] = (ce_sum(res_bag) + ce_sum(res_ent)) * (1.0 / num_bags)


# ----------------------------------------------------------------------------
# One-time parameter prep (lane pad 53 -> 128, weights to bf16).  Hoisted out
# of the per-call path per the performance review.
# ----------------------------------------------------------------------------
def prepare_params(params):
    f32, bf16 = jnp.float32, jnp.bfloat16

    def pad_w(w):
        w = jnp.asarray(w, f32)
        return jnp.zeros((HIDDEN, CPAD), bf16).at[:, :NUM_CLASSES].set(w.astype(bf16))

    def pad_b(b):
        b = jnp.asarray(b, f32).reshape(1, NUM_CLASSES)
        return jnp.zeros((1, CPAD), f32).at[:, :NUM_CLASSES].set(b)

    return {"dec_w": pad_w(params["dec_w"]), "dec_b": pad_b(params["dec_b"]),
            "ent_w": pad_w(params["ent_w"]), "ent_b": pad_b(params["ent_b"])}


# ----------------------------------------------------------------------------
# Model forward (post-BERT part)
# ----------------------------------------------------------------------------
@functools.partial(jax.jit, static_argnames=("num_bags", "max_bag"))
def model_forward(bert_pooled, entity_pooled, total_shape, y_batch, prepped,
                  num_bags, max_bag):
    n = bert_pooled.shape[0]
    b = entity_pooled.shape[0]            # == num_bags
    max_bag = max(8, _round_up(max_bag, 8))

    # Row tiling of the bert stream: 512-row tiles for big N, single tile else.
    tm = 512 if n > 512 else _round_up(max(n, 8), 8)
    # Only pad rows to a multiple of 8 if strictly needed (no full zero-pad copy).
    if n % 8:
        bert_pooled = jnp.pad(bert_pooled, ((0, (-n) % 8), (0, 0)))
    rows = bert_pooled.shape[0]
    grid_rows = (rows + tm - 1) // tm
    be_rows = grid_rows * tm + max_bag    # slack so pl.ds(beg, max_bag) stays in-bounds

    b_pad = _round_up(b, 8)
    ent_pad = jnp.zeros((b_pad, HIDDEN), jnp.bfloat16).at[:b].set(
        entity_pooled.astype(jnp.bfloat16))
    lab_pad = jnp.zeros((b_pad, 1), jnp.int32).at[:b, 0].set(
        y_batch.astype(jnp.int32))
    ts = total_shape.astype(jnp.int32)

    # Explicit VMEM budget (batch_e scratch + double-buffered tiles + constants).
    x_bytes = jnp.dtype(bert_pooled.dtype).itemsize
    vmem = (be_rows * CPAD * 4 + b_pad * CPAD * 4        # scratches
            + 2 * tm * HIDDEN * x_bytes                  # x tile (double-buffered)
            + 2 * 2 * HIDDEN * CPAD * 2                  # two bf16 weights
            + 2 * 2 * CPAD * 4                           # biases
            + 2 * b_pad * HIDDEN * 2                     # entity block
            + 2 * b_pad * 128 * 4                        # labels (lane padded)
            + 2 * 8 * 128 * 4)                           # output
    vmem_limit = int(min(int(vmem * 1.25) + (16 << 20), 100 << 20))

    kernel = functools.partial(_fused_kernel, num_bags=num_bags,
                               max_bag=max_bag, tm=tm)

    loss = pl.pallas_call(
        kernel,
        out_shape=jax.ShapeDtypeStruct((1, 1), jnp.float32),
        grid_spec=pltpu.PrefetchScalarGridSpec(
            num_scalar_prefetch=1,
            grid=(grid_rows,),
            in_specs=[
                pl.BlockSpec((tm, HIDDEN), lambda i, ts: (i, 0)),     # x tile
                pl.BlockSpec((HIDDEN, CPAD), lambda i, ts: (0, 0)),   # w_dec (bf16)
                pl.BlockSpec((1, CPAD), lambda i, ts: (0, 0)),        # b_dec
                pl.BlockSpec((b_pad, HIDDEN), lambda i, ts: (0, 0)),  # entity pooled
                pl.BlockSpec((HIDDEN, CPAD), lambda i, ts: (0, 0)),   # w_ent (bf16)
                pl.BlockSpec((1, CPAD), lambda i, ts: (0, 0)),        # b_ent
                pl.BlockSpec((b_pad, 1), lambda i, ts: (0, 0)),       # labels
            ],
            out_specs=pl.BlockSpec((1, 1), lambda i, ts: (0, 0)),
            scratch_shapes=[
                pltpu.VMEM((be_rows, CPAD), jnp.float32),   # batch_e (resident)
                pltpu.VMEM((b_pad, CPAD), jnp.float32),     # per-bag scores
            ],
        ),
        compiler_params=pltpu.CompilerParams(
            dimension_semantics=("arbitrary",),   # scratch carries across steps
            vmem_limit_bytes=vmem_limit),
    )(ts, bert_pooled, prepped["dec_w"], prepped["dec_b"],
      ent_pad, prepped["ent_w"], prepped["ent_b"], lab_pad)

    return loss[0, 0]


# ----------------------------------------------------------------------------
# Pure-JAX reference (identical math to the PyTorch forward; keeps the explicit
# bag_rep / Decoder / diag path so it also validates the algebraic shortcut).
# ----------------------------------------------------------------------------
def reference_forward(bert_pooled, entity_pooled, total_shape, y_batch, params):
    w_dec, b_dec = params["dec_w"], params["dec_b"]
    w_ent, b_ent = params["ent_w"], params["ent_b"]
    sent_emb = jnp.tanh(bert_pooled)
    batch_e = sent_emb @ w_dec + b_dec
    scores = []
    ts = list(total_shape)
    for i in range(len(ts) - 1):
        beg, end = ts[i], ts[i + 1]
        we = batch_e[beg:end]
        se = sent_emb[beg:end]
        alpha = jax.nn.softmax(we.T, axis=1)
        bag_rep = alpha @ se
        o = bag_rep @ w_dec + b_dec
        scores.append(jnp.diag(o))
    res_bag = jnp.stack(scores)
    res_entity = entity_pooled @ w_ent + b_ent

    def ce(logits, y):
        lse = jax.nn.logsumexp(logits, axis=1)
        true = logits[jnp.arange(logits.shape[0]), y]
        return jnp.mean(lse - true)

    return ce(res_bag, y_batch) + ce(res_entity, y_batch)


if __name__ == "__main__":
    key = jax.random.PRNGKey(0)
    k1, k2, k3, k4, k5, k6 = jax.random.split(key, 6)

    N_SENT = 8                       # total sentences across all bags
    total_shape_list = [0, 5, 8]     # 2 bags: sizes 5 and 3
    B = len(total_shape_list) - 1

    bert_pooled_f32 = jax.random.normal(k1, (N_SENT, HIDDEN), jnp.float32) * 0.5
    entity_pooled_f32 = jax.random.normal(k2, (B, HIDDEN), jnp.float32) * 0.5
    y_batch = jax.random.randint(k3, (B,), 0, NUM_CLASSES, jnp.int32)

    params = {
        "dec_w": jax.random.normal(k4, (HIDDEN, NUM_CLASSES), jnp.float32) * 0.02,
        "dec_b": jnp.zeros((1, NUM_CLASSES), jnp.float32),
        "ent_w": jax.random.normal(k5, (HIDDEN, NUM_CLASSES), jnp.float32) * 0.02,
        "ent_b": jax.random.normal(k6, (1, NUM_CLASSES), jnp.float32) * 0.02,
    }
    prepped = prepare_params(params)     # one-time padding/bf16 cast (hoisted)

    # Upstream BERT pooled outputs supplied in bf16 end-to-end.
    bert_pooled = bert_pooled_f32.astype(jnp.bfloat16)
    entity_pooled = entity_pooled_f32.astype(jnp.bfloat16)

    total_shape = jnp.asarray(total_shape_list, jnp.int32)
    max_bag = max(total_shape_list[i + 1] - total_shape_list[i] for i in range(B))
    assert all(total_shape_list[i + 1] > total_shape_list[i] for i in range(B)), \
        "empty bags not expected"

    loss = model_forward(bert_pooled, entity_pooled, total_shape, y_batch,
                         prepped, num_bags=B, max_bag=max_bag)
    loss = jax.block_until_ready(loss)

    # Reference in f32 on the same bf16-quantized activations; bf16 weights in
    # the kernel widen the tolerance vs the f32 reference.
    ref = reference_forward(bert_pooled.astype(jnp.float32),
                            entity_pooled.astype(jnp.float32),
                            total_shape_list, y_batch, params)
    assert jnp.allclose(loss, ref, rtol=1e-2, atol=1e-2), (loss, ref)

    print("KERNEL_OK")
</pallas_src>

<mosaic_0001>
module attributes {stable_mosaic.version = 11 : i64} {
  func.func @_fused_kernel(%arg0: i32, %arg1: memref<3xi32, #tpu.memory_space<smem>>, %arg2: memref<8x768xbf16, #tpu.memory_space<vmem>>, %arg3: memref<768x128xbf16, #tpu.memory_space<vmem>>, %arg4: memref<1x128xf32, #tpu.memory_space<vmem>>, %arg5: memref<8x768xbf16, #tpu.memory_space<vmem>>, %arg6: memref<768x128xbf16, #tpu.memory_space<vmem>>, %arg7: memref<1x128xf32, #tpu.memory_space<vmem>>, %arg8: memref<8x1xi32, #tpu.memory_space<vmem>>, %arg9: memref<1x1xf32, #tpu.memory_space<vmem>>, %arg10: memref<16x128xf32, #tpu.memory_space<vmem>>, %arg11: memref<8x128xf32, #tpu.memory_space<vmem>>) attributes {dimension_semantics = [#tpu.dimension_semantics<arbitrary>], iteration_bounds = array<i64: 1>, scalar_prefetch = 1 : i64, scratch_operands = 2 : i64, tpu.core_type = #tpu.core_type<tc>, window_params = [{transform_indices = @transform_0, window_bounds = array<i64: 8, 768>}, {pipeline_mode = #tpu.pipeline_mode<synchronous>, transform_indices = @transform_1, window_bounds = array<i64: 768, 128>}, {pipeline_mode = #tpu.pipeline_mode<synchronous>, transform_indices = @transform_2, window_bounds = array<i64: 1, 128>}, {pipeline_mode = #tpu.pipeline_mode<synchronous>, transform_indices = @transform_3, window_bounds = array<i64: 8, 768>}, {pipeline_mode = #tpu.pipeline_mode<synchronous>, transform_indices = @transform_4, window_bounds = array<i64: 768, 128>}, {pipeline_mode = #tpu.pipeline_mode<synchronous>, transform_indices = @transform_5, window_bounds = array<i64: 1, 128>}, {pipeline_mode = #tpu.pipeline_mode<synchronous>, transform_indices = @transform_6, window_bounds = array<i64: 8, 1>}, {pipeline_mode = #tpu.pipeline_mode<synchronous>, transform_indices = @transform_7, window_bounds = array<i64: 1, 1>}]} {
    %c0 = arith.constant 0 : index
    %c0_0 = arith.constant 0 : index
    %0 = vector.load %arg2[%c0, %c0_0] : memref<8x768xbf16, #tpu.memory_space<vmem>>, vector<8x768xbf16>
    %1 = arith.extf %0 : vector<8x768xbf16> to vector<8x768xf32>
    %2 = math.tanh %1 : vector<8x768xf32>
    %3 = arith.truncf %2 : vector<8x768xf32> to vector<8x768xbf16>
    %c8_i32 = arith.constant 8 : i32
    %4 = arith.muli %arg0, %c8_i32 : i32
    %5 = tpu.assume_multiple %4, 8 : i32
    %c0_1 = arith.constant 0 : index
    %c0_2 = arith.constant 0 : index
    %6 = vector.load %arg3[%c0_1, %c0_2] : memref<768x128xbf16, #tpu.memory_space<vmem>>, vector<768x128xbf16>
    %cst = arith.constant dense<0.000000e+00> : vector<8x128xf32>
    %7 = tpu.matmul %3, %6, %cst {dimension_numbers = #tpu.dot_dimension_numbers<[1], [0], [0], [1], [0, 0, 1, 1], [], []>} : vector<8x768xbf16>, vector<768x128xbf16>, vector<8x128xf32> -> vector<8x128xf32>
    %c0_3 = arith.constant 0 : index
    %c0_4 = arith.constant 0 : index
    %8 = vector.load %arg4[%c0_3, %c0_4] : memref<1x128xf32, #tpu.memory_space<vmem>>, vector<1x128xf32>
    %9 = vector.broadcast %8 : vector<1x128xf32> to vector<8x128xf32>
    %10 = arith.addf %7, %9 : vector<8x128xf32>
    %11 = arith.index_cast %5 : i32 to index
    %c0_5 = arith.constant 0 : index
    %12 = vector.load %arg10[%11, %c0_5] : memref<16x128xf32, #tpu.memory_space<vmem>>, vector<8x128xf32>
    tpu.vector_store %arg10[%11, %c0_5], %10 {strides = array<i32>} : memref<16x128xf32, #tpu.memory_space<vmem>>, vector<8x128xf32>,
    %c0_i32 = arith.constant 0 : i32
    %13 = arith.cmpi eq, %arg0, %c0_i32 : i32
    %14 = arith.extui %13 : i1 to i32
    %c0_i32_6 = arith.constant 0 : i32
    %15 = arith.cmpi ne, %14, %c0_i32_6 : i32
    scf.if %15 {
      %cst_7 = arith.constant 0.000000e+00 : f32
      %16 = vector.broadcast %cst_7 : f32 to vector<8x128xf32>
      %c0_8 = arith.constant 0 : index
      %c0_9 = arith.constant 0 : index
      %17 = vector.load %arg11[%c0_8, %c0_9] : memref<8x128xf32, #tpu.memory_space<vmem>>, vector<8x128xf32>
      tpu.vector_store %arg11[%c0_8, %c0_9], %16 {strides = array<i32>} : memref<8x128xf32, #tpu.memory_space<vmem>>, vector<8x128xf32>,
      %18 = tpu.iota {dimensions = array<i32: 0>} : vector<8x1xi32>
      %c0_i32_10 = arith.constant 0 : i32
      %c2_i32 = arith.constant 2 : i32
      %19 = arith.addi %c0_i32_10, %c2_i32 : i32
      %c1_i32 = arith.constant 1 : i32
      scf.for %arg12 = %c0_i32_10 to %19 step %c1_i32  : i32 {
        %c1_i32_42 = arith.constant 1 : i32
        %85 = arith.muli %arg12, %c1_i32_42 : i32
        %c0_i32_43 = arith.constant 0 : i32
        %86 = arith.addi %c0_i32_43, %85 : i32
        %87 = arith.index_cast %86 : i32 to index
        %88 = memref.load %arg1[%87] : memref<3xi32, #tpu.memory_space<smem>>
        %c1_i32_44 = arith.constant 1 : i32
        %89 = arith.addi %86, %c1_i32_44 : i32
        %90 = arith.index_cast %89 : i32 to index
        %91 = memref.load %arg1[%90] : memref<3xi32, #tpu.memory_space<smem>>
        %92 = arith.subi %91, %88 : i32
        %93 = arith.index_cast %88 : i32 to index
        %c0_45 = arith.constant 0 : index
        %94 = vector.load %arg10[%93, %c0_45] : memref<16x128xf32, #tpu.memory_space<vmem>>, vector<8x128xf32>
        %95 = vector.broadcast %92 : i32 to vector<8x1xi32>
        %96 = arith.cmpi slt, %18, %95 : vector<8x1xi32>
        %cst_46 = arith.constant -1.000000e+30 : f32
        %97 = vector.shape_cast %96 : vector<8x1xi1> to vector<8x1xi1>
        %98 = vector.broadcast %97 : vector<8x1xi1> to vector<8x128xi1>
        %99 = vector.broadcast %cst_46 : f32 to vector<8x128xf32>
        %100 = arith.select %98, %94, %99 : vector<8x128xi1>, vector<8x128xf32>
        %cst_47 = arith.constant dense<0xFF800000> : vector<128xf32>
        %101 = vector.multi_reduction <maximumf>, %100, %cst_47 [0] : vector<8x128xf32> to vector<128xf32>
        %102 = vector.shape_cast %101 : vector<128xf32> to vector<1x128xf32>
        %103 = vector.broadcast %102 : vector<1x128xf32> to vector<8x128xf32>
        %104 = arith.subf %100, %103 : vector<8x128xf32>
        %105 = math.exp %104 : vector<8x128xf32>
        %cst_48 = arith.constant dense<0.000000e+00> : vector<128xf32>
        %106 = vector.multi_reduction <add>, %105, %cst_48 [0] : vector<8x128xf32> to vector<128xf32>
        %107 = vector.shape_cast %106 : vector<128xf32> to vector<1x128xf32>
        %cst_49 = arith.constant 0.000000e+00 : f32
        %108 = vector.shape_cast %96 : vector<8x1xi1> to vector<8x1xi1>
        %109 = vector.broadcast %108 : vector<8x1xi1> to vector<8x128xi1>
        %110 = vector.broadcast %cst_49 : f32 to vector<8x128xf32>
        %111 = arith.select %109, %94, %110 : vector<8x128xi1>, vector<8x128xf32>
        %112 = arith.mulf %105, %111 : vector<8x128xf32>
        %cst_50 = arith.constant dense<0.000000e+00> : vector<128xf32>
        %113 = vector.multi_reduction <add>, %112, %cst_50 [0] : vector<8x128xf32> to vector<128xf32>
        %114 = vector.shape_cast %113 : vector<128xf32> to vector<1x128xf32>
        %115 = arith.divf %114, %107 : vector<1x128xf32>
        %116 = arith.index_cast %86 : i32 to index
        %c0_51 = arith.constant 0 : index
        %117 = vector.load %arg11[%116, %c0_51] : memref<8x128xf32, #tpu.memory_space<vmem>>, vector<1x128xf32>
        tpu.vector_store %arg11[%116, %c0_51], %115 {strides = array<i32>} : memref<8x128xf32, #tpu.memory_space<vmem>>, vector<1x128xf32>,
      }
      %c2_i32_11 = arith.constant 2 : i32
      %c0_12 = arith.constant 0 : index
      %c0_13 = arith.constant 0 : index
      %20 = vector.load %arg11[%c0_12, %c0_13] : memref<8x128xf32, #tpu.memory_space<vmem>>, vector<8x128xf32>
      %c0_14 = arith.constant 0 : index
      %c0_15 = arith.constant 0 : index
      %21 = vector.load %arg5[%c0_14, %c0_15] : memref<8x768xbf16, #tpu.memory_space<vmem>>, vector<8x768xbf16>
      %c0_16 = arith.constant 0 : index
      %c0_17 = arith.constant 0 : index
      %22 = vector.load %arg6[%c0_16, %c0_17] : memref<768x128xbf16, #tpu.memory_space<vmem>>, vector<768x128xbf16>
      %cst_18 = arith.constant dense<0.000000e+00> : vector<8x128xf32>
      %23 = tpu.matmul %21, %22, %cst_18 {dimension_numbers = #tpu.dot_dimension_numbers<[1], [0], [0], [1], [0, 0, 1, 1], [], []>} : vector<8x768xbf16>, vector<768x128xbf16>, vector<8x128xf32> -> vector<8x128xf32>
      %c0_19 = arith.constant 0 : index
      %c0_20 = arith.constant 0 : index
      %24 = vector.load %arg7[%c0_19, %c0_20] : memref<1x128xf32, #tpu.memory_space<vmem>>, vector<1x128xf32>
      %25 = vector.broadcast %24 : vector<1x128xf32> to vector<8x128xf32>
      %26 = arith.addf %23, %25 : vector<8x128xf32>
      %c0_21 = arith.constant 0 : index
      %c0_22 = arith.constant 0 : index
      %27 = vector.load %arg8[%c0_21, %c0_22] : memref<8x1xi32, #tpu.memory_space<vmem>>, vector<8x1xi32>
      %28 = tpu.iota {dimensions = array<i32: 0>} : vector<8x1xi32>
      %c2_i32_23 = arith.constant 2 : i32
      %29 = vector.broadcast %c2_i32_23 : i32 to vector<8x1xi32>
      %30 = arith.cmpi slt, %28, %29 : vector<8x1xi32>
      %31 = tpu.iota {dimensions = array<i32: 1>} : vector<8x128xi32>
      %c53_i32 = arith.constant 53 : i32
      %32 = vector.broadcast %c53_i32 : i32 to vector<8x128xi32>
      %33 = arith.cmpi slt, %31, %32 : vector<8x128xi32>
      %cst_24 = arith.constant -1.000000e+30 : f32
      %34 = vector.broadcast %cst_24 : f32 to vector<8x128xf32>
      %35 = arith.select %33, %20, %34 : vector<8x128xi1>, vector<8x128xf32>
      %cst_25 = arith.constant dense<0xFF800000> : vector<8xf32>
      %36 = vector.multi_reduction <maximumf>, %35, %cst_25 [1] : vector<8x128xf32> to vector<8xf32>
      %37 = vector.shape_cast %36 : vector<8xf32> to vector<8x1xf32>
      %38 = vector.broadcast %37 : vector<8x1xf32> to vector<8x128xf32>
      %39 = arith.subf %35, %38 : vector<8x128xf32>
      %40 = math.exp %39 : vector<8x128xf32>
      %cst_26 = arith.constant dense<0.000000e+00> : vector<8xf32>
      %41 = vector.multi_reduction <add>, %40, %cst_26 [1] : vector<8x128xf32> to vector<8xf32>
      %42 = vector.shape_cast %41 : vector<8xf32> to vector<8x1xf32>
      %43 = math.log %42 : vector<8x1xf32>
      %44 = arith.addf %43, %37 : vector<8x1xf32>
      %45 = vector.broadcast %27 : vector<8x1xi32> to vector<8x128xi32>
      %46 = arith.cmpi eq, %31, %45 : vector<8x128xi32>
      %cst_27 = arith.constant 0.000000e+00 : f32
      %47 = vector.broadcast %cst_27 : f32 to vector<8x128xf32>
      %48 = arith.select %46, %35, %47 : vector<8x128xi1>, vector<8x128xf32>
      %cst_28 = arith.constant dense<0.000000e+00> : vector<8xf32>
      %49 = vector.multi_reduction <add>, %48, %cst_28 [1] : vector<8x128xf32> to vector<8xf32>
      %50 = vector.shape_cast %49 : vector<8xf32> to vector<8x1xf32>
      %51 = arith.subf %44, %50 : vector<8x1xf32>
      %cst_29 = arith.constant 0.000000e+00 : f32
      %52 = vector.broadcast %cst_29 : f32 to vector<8x1xf32>
      %53 = arith.select %30, %51, %52 : vector<8x1xi1>, vector<8x1xf32>
      %cst_30 = arith.constant dense<0.000000e+00> : vector<1xf32>
      %54 = vector.multi_reduction <add>, %53, %cst_30 [0] : vector<8x1xf32> to vector<1xf32>
      %55 = vector.shape_cast %54 : vector<1xf32> to vector<1x1xf32>
      %56 = tpu.iota {dimensions = array<i32: 1>} : vector<8x128xi32>
      %c53_i32_31 = arith.constant 53 : i32
      %57 = vector.broadcast %c53_i32_31 : i32 to vector<8x128xi32>
      %58 = arith.cmpi slt, %56, %57 : vector<8x128xi32>
      %cst_32 = arith.constant -1.000000e+30 : f32
      %59 = vector.broadcast %cst_32 : f32 to vector<8x128xf32>
      %60 = arith.select %58, %26, %59 : vector<8x128xi1>, vector<8x128xf32>
      %cst_33 = arith.constant dense<0xFF800000> : vector<8xf32>
      %61 = vector.multi_reduction <maximumf>, %60, %cst_33 [1] : vector<8x128xf32> to vector<8xf32>
      %62 = vector.shape_cast %61 : vector<8xf32> to vector<8x1xf32>
      %63 = vector.broadcast %62 : vector<8x1xf32> to vector<8x128xf32>
      %64 = arith.subf %60, %63 : vector<8x128xf32>
      %65 = math.exp %64 : vector<8x128xf32>
      %cst_34 = arith.constant dense<0.000000e+00> : vector<8xf32>
      %66 = vector.multi_reduction <add>, %65, %cst_34 [1] : vector<8x128xf32> to vector<8xf32>
      %67 = vector.shape_cast %66 : vector<8xf32> to vector<8x1xf32>
      %68 = math.log %67 : vector<8x1xf32>
      %69 = arith.addf %68, %62 : vector<8x1xf32>
      %70 = vector.broadcast %27 : vector<8x1xi32> to vector<8x128xi32>
      %71 = arith.cmpi eq, %56, %70 : vector<8x128xi32>
      %cst_35 = arith.constant 0.000000e+00 : f32
      %72 = vector.broadcast %cst_35 : f32 to vector<8x128xf32>
      %73 = arith.select %71, %60, %72 : vector<8x128xi1>, vector<8x128xf32>
      %cst_36 = arith.constant dense<0.000000e+00> : vector<8xf32>
      %74 = vector.multi_reduction <add>, %73, %cst_36 [1] : vector<8x128xf32> to vector<8xf32>
      %75 = vector.shape_cast %74 : vector<8xf32> to vector<8x1xf32>
      %76 = arith.subf %69, %75 : vector<8x1xf32>
      %cst_37 = arith.constant 0.000000e+00 : f32
      %77 = vector.broadcast %cst_37 : f32 to vector<8x1xf32>
      %78 = arith.select %30, %76, %77 : vector<8x1xi1>, vector<8x1xf32>
      %cst_38 = arith.constant dense<0.000000e+00> : vector<1xf32>
      %79 = vector.multi_reduction <add>, %78, %cst_38 [0] : vector<8x1xf32> to vector<1xf32>
      %80 = vector.shape_cast %79 : vector<1xf32> to vector<1x1xf32>
      %81 = arith.addf %55, %80 : vector<1x1xf32>
      %cst_39 = arith.constant 5.000000e-01 : f32
      %82 = vector.broadcast %cst_39 : f32 to vector<1x1xf32>
      %83 = arith.mulf %81, %82 : vector<1x1xf32>
      %c0_40 = arith.constant 0 : index
      %c0_41 = arith.constant 0 : index
      %84 = vector.load %arg9[%c0_40, %c0_41] : memref<1x1xf32, #tpu.memory_space<vmem>>, vector<1x1xf32>
      tpu.vector_store %arg9[%c0_40, %c0_41], %83 {strides = array<i32>} : memref<1x1xf32, #tpu.memory_space<vmem>>, vector<1x1xf32>,
    } else {
    }
    return
  }
  func.func @transform_0(%arg0: i32, %arg1: memref<3xi32, #tpu.memory_space<smem>>) -> (i32, i32) {
    %c0_i32 = arith.constant 0 : i32
    %c0_i32_0 = arith.constant 0 : i32
    return %arg0, %c0_i32 : i32, i32
  }
  func.func @transform_1(%arg0: i32, %arg1: memref<3xi32, #tpu.memory_space<smem>>) -> (i32, i32) {
    %c0_i32 = arith.constant 0 : i32
    %c0_i32_0 = arith.constant 0 : i32
    %c0_i32_1 = arith.constant 0 : i32
    return %c0_i32, %c0_i32_0 : i32, i32
  }
  func.func @transform_2(%arg0: i32, %arg1: memref<3xi32, #tpu.memory_space<smem>>) -> (i32, i32) {
    %c0_i32 = arith.constant 0 : i32
    %c0_i32_0 = arith.constant 0 : i32
    %c0_i32_1 = arith.constant 0 : i32
    return %c0_i32, %c0_i32_0 : i32, i32
  }
  func.func @transform_3(%arg0: i32, %arg1: memref<3xi32, #tpu.memory_space<smem>>) -> (i32, i32) {
    %c0_i32 = arith.constant 0 : i32
    %c0_i32_0 = arith.constant 0 : i32
    %c0_i32_1 = arith.constant 0 : i32
    return %c0_i32, %c0_i32_0 : i32, i32
  }
  func.func @transform_4(%arg0: i32, %arg1: memref<3xi32, #tpu.memory_space<smem>>) -> (i32, i32) {
    %c0_i32 = arith.constant 0 : i32
    %c0_i32_0 = arith.constant 0 : i32
    %c0_i32_1 = arith.constant 0 : i32
    return %c0_i32, %c0_i32_0 : i32, i32
  }
  func.func @transform_5(%arg0: i32, %arg1: memref<3xi32, #tpu.memory_space<smem>>) -> (i32, i32) {
    %c0_i32 = arith.constant 0 : i32
    %c0_i32_0 = arith.constant 0 : i32
    %c0_i32_1 = arith.constant 0 : i32
    return %c0_i32, %c0_i32_0 : i32, i32
  }
  func.func @transform_6(%arg0: i32, %arg1: memref<3xi32, #tpu.memory_space<smem>>) -> (i32, i32) {
    %c0_i32 = arith.constant 0 : i32
    %c0_i32_0 = arith.constant 0 : i32
    %c0_i32_1 = arith.constant 0 : i32
    return %c0_i32, %c0_i32_0 : i32, i32
  }
  func.func @transform_7(%arg0: i32, %arg1: memref<3xi32, #tpu.memory_space<smem>>) -> (i32, i32) {
    %c0_i32 = arith.constant 0 : i32
    %c0_i32_0 = arith.constant 0 : i32
    %c0_i32_1 = arith.constant 0 : i32
    return %c0_i32, %c0_i32_0 : i32, i32
  }
}

</mosaic_0001>

<llo_original>
// kernel: model_forward.1
$region0: #{model_forward.1}
  #allocation0 [shape = 'u32[]', space=smem, size = 0x4, offset = 0x4, fixed_abs, tag = 'smem constant byte address 0x4 - core index']
  #allocation1 [shape = 'u32[144,128]{1,0:T(1,128)}', space=vmem, size = 0x12000, scoped, tag = 'internal scratch']
  #allocation2 [shape = 'f32[16,128]{1,0:T(8,128)}', space=vmem, size = 0x2000, scoped, tag = 'scratch operand']
  #allocation3 [shape = 'f32[8,128]{1,0:T(8,128)}', space=vmem, size = 0x1000, scoped, tag = 'scratch operand']
  #allocation4 [shape = 's32[1]{0}', space=sflag, size = 0x4, scoped, tag = 'scoped memory for model_forward.1']
  #allocation5 [shape = 'u8[512]{0}', space=smem, size = 0x200, scoped, tag = 'prefetched SMEM operand 0']
  %s0 = inlined_call_operand.vmem [shape: s32[3], index: 0, kind: input, shape index: {}]
  %s1 = inlined_call_operand.vmem [shape: bf16[8,768], index: 1, kind: input, shape index: {}]
  %s2 = inlined_call_operand.hbm [shape: bf16[768,128], index: 2, kind: input, shape index: {}]
  %s3 = inlined_call_operand.vmem [shape: f32[1,128], index: 3, kind: input, shape index: {}]
  %s4 = inlined_call_operand.vmem [shape: bf16[8,768], index: 4, kind: input, shape index: {}]
  %s5 = inlined_call_operand.hbm [shape: bf16[768,128], index: 5, kind: input, shape index: {}]
  %s6 = inlined_call_operand.vmem [shape: f32[1,128], index: 6, kind: input, shape index: {}]
  %s7 = inlined_call_operand.vmem [shape: s32[8,1], index: 7, kind: input, shape index: {}]
  %s8 = inlined_call_operand.hbm [shape: f32[1,1], index: 8, kind: output, shape index: {}]
  %s9 = sld [smem:[#allocation0]]
  $region57: #{model_forward.1} parent=0
    _
  %s11 = ssub.s32 1, %s9
  %s12 = scalar_select 0, %s11, %s9
  %s13 = sshll.u32 %s0, 4
  %s14 = int_to_ptr.vmem [resolvable:$true] %s13
  %16 = dma.vmem_to_smem %s14, 16, [#allocation5], [#allocation4]
  %17 = dma.done [#allocation4], 16
  %18 = sfence
  $region1: #{model_forward.1} parent=0
    #allocation6 [shape = 'u8[196608]{0}', space=vmem, size = 0x30000, scoped, tag = 'input window, operand 2, single buffered']
    #allocation7 [shape = 's32[1]{0}', space=sflag, size = 0x4, scoped, tag = 'scoped memory for model_forward.1']
    #allocation8 [shape = 's32[1]{0}', space=sflag, size = 0x4, scoped, tag = 'scoped memory for model_forward.1']
    #allocation9 [shape = 'u8[196608]{0}', space=vmem, size = 0x30000, scoped, tag = 'input window, operand 5, single buffered']
    #allocation10 [shape = 's32[1]{0}', space=sflag, size = 0x4, scoped, tag = 'scoped memory for model_forward.1']
    #allocation11 [shape = 'u8[512]{0}', space=vmem, size = 0x400, scoped, tag = 'output window, operand 0, single buffered']
    %19 = vsyncpa [#allocation7], 0
    %20 = vsyncpa [#allocation10], 0
    %21 = vsyncpa [#allocation8], 0
    // Predicated region
    $region2: #{model_forward.1} parent=1 // pred_check
      _
    $region3: #{model_forward.1} parent=1 // pred_check_branch
      %23 = sbr.rel (0) target = $region5
    $region4: #{model_forward.1} parent=1 // pred_region
      _
    $region5: #{model_forward.1} parent=1 // pred_fallthru
      _
    // Predicated region
    $region6: #{model_forward.1} parent=1 // pred_check
      _
    $region7: #{model_forward.1} parent=1 // pred_check_branch
      %25 = sbr.rel (0) target = $region9
    $region8: #{model_forward.1} parent=1 // pred_region
      %s27 = ssub.s32 6144, 6144
      %28 = vsyncadd [#allocation7], %s27
      %s29 = sshll.u32 [#allocation6], 4
      %s30 = int_to_ptr.vmem [resolvable:$true] %s29
      %35 = dma.hbm_to_vmem [thread:$0]  %s2, 6144, %s30, [#allocation7], 64, 64, 4
    $region9: #{model_forward.1} parent=1 // pred_fallthru
      _
    // Predicated region
    $region10: #{model_forward.1} parent=1 // pred_check
      _
    $region11: #{model_forward.1} parent=1 // pred_check_branch
      %37 = sbr.rel (0) target = $region13
    $region12: #{model_forward.1} parent=1 // pred_region
      _
    $region13: #{model_forward.1} parent=1 // pred_fallthru
      _
    // Predicated region
    $region14: #{model_forward.1} parent=1 // pred_check
      _
    $region15: #{model_forward.1} parent=1 // pred_check_branch
      %39 = sbr.rel (0) target = $region17
    $region16: #{model_forward.1} parent=1 // pred_region
      _
    $region17: #{model_forward.1} parent=1 // pred_fallthru
      _
    // Predicated region
    $region18: #{model_forward.1} parent=1 // pred_check
      _
    $region19: #{model_forward.1} parent=1 // pred_check_branch
      %41 = sbr.rel (0) target = $region21
    $region20: #{model_forward.1} parent=1 // pred_region
      %s43 = ssub.s32 6144, 6144
      %44 = vsyncadd [#allocation10], %s43
      %s45 = sshll.u32 [#allocation9], 4
      %s46 = int_to_ptr.vmem [resolvable:$true] %s45
      %51 = dma.hbm_to_vmem [thread:$0]  %s5, 6144, %s46, [#allocation10], 64, 64, 4
    $region21: #{model_forward.1} parent=1 // pred_fallthru
      _
    // Predicated region
    $region22: #{model_forward.1} parent=1 // pred_check
      _
    $region23: #{model_forward.1} parent=1 // pred_check_branch
      %53 = sbr.rel (0) target = $region25
    $region24: #{model_forward.1} parent=1 // pred_region
      _
    $region25: #{model_forward.1} parent=1 // pred_fallthru
      _
    // Predicated region
    $region26: #{model_forward.1} parent=1 // pred_check
      _
    $region27: #{model_forward.1} parent=1 // pred_check_branch
      %55 = sbr.rel (0) target = $region29
    $region28: #{model_forward.1} parent=1 // pred_region
      _
    $region29: #{model_forward.1} parent=1 // pred_fallthru
      _
    // Predicated region
    $region30: #{model_forward.1} parent=1 // pred_check
      _
    $region31: #{model_forward.1} parent=1 // pred_check_branch
      %57 = sbr.rel (0) target = $region33
    $region32: #{model_forward.1} parent=1 // pred_region
      %58 = dma.done [#allocation7], 6144
    $region33: #{model_forward.1} parent=1 // pred_fallthru
      _
    // Predicated region
    $region34: #{model_forward.1} parent=1 // pred_check
      _
    $region35: #{model_forward.1} parent=1 // pred_check_branch
      %60 = sbr.rel (0) target = $region37
    $region36: #{model_forward.1} parent=1 // pred_region
      %61 = dma.done [#allocation10], 6144
    $region37: #{model_forward.1} parent=1 // pred_fallthru
      _
    %v63 = vld [vmem:[%s1] sm:$0xff]
    %v64 = vld [vmem:[%s1 + $0x8] sm:$0xff]
    %v65 = vld [vmem:[%s1 + $0x10] sm:$0xff]
    %v66 = vunpack.c.l.bf16 %v63
    %v67 = vunpack.c.h.bf16 %v63
    %v68 = vunpack.c.l.bf16 %v64
    %v69 = vunpack.c.h.bf16 %v64
    %v70 = vunpack.c.l.bf16 %v65
    %v71 = vunpack.c.h.bf16 %v65
    %v72 = vtanh.pop %v66
    %v73 = vtanh.pop %v67
    %v74 = vtanh.pop %v68
    %v75 = vtanh.pop %v69
    %v76 = vtanh.pop %v70
    %v77 = vtanh.pop %v71
    %v78 = vpack.c.bf16 %v72, %v72
    %v79 = vpack.c.bf16 %v73, %v73
    %v80 = vpack.c.bf16 %v74, %v74
    %v81 = vpack.c.bf16 %v75, %v75
    %v82 = vpack.c.bf16 %v76, %v76
    %v83 = vpack.c.bf16 %v77, %v77
    %s84 = smul.u32 0, 8
    %v85 = vld [vmem:[#allocation6] sm:$0xf]
    %v86 = vld [vmem:[#allocation6 + $0x4] sm:$0xf]
    %v87 = vld [vmem:[#allocation6 + $0x8] sm:$0xf]
    %v88 = vld [vmem:[#allocation6 + $0xc] sm:$0xf]
    %v89 = vld [vmem:[#allocation6 + $0x10] sm:$0xf]
    %v90 = vld [vmem:[#allocation6 + $0x14] sm:$0xf]
    %v91 = vld [vmem:[#allocation6 + $0x18] sm:$0xf]
    %v92 = vld [vmem:[#allocation6 + $0x1c] sm:$0xf]
    %v93 = vld [vmem:[#allocation6 + $0x20] sm:$0xf]
    %v94 = vld [vmem:[#allocation6 + $0x24] sm:$0xf]
    %v95 = vld [vmem:[#allocation6 + $0x28] sm:$0xf]
    %v96 = vld [vmem:[#allocation6 + $0x2c] sm:$0xf]
    %v97 = vld [vmem:[#allocation6 + $0x30] sm:$0xf]
    %v98 = vld [vmem:[#allocation6 + $0x34] sm:$0xf]
    %v99 = vld [vmem:[#allocation6 + $0x38] sm:$0xf]
    %v100 = vld [vmem:[#allocation6 + $0x3c] sm:$0xf]
    %v101 = vld [vmem:[#allocation6 + $0x40] sm:$0xf]
    %v102 = vld [vmem:[#allocation6 + $0x44] sm:$0xf]
    %v103 = vld [vmem:[#allocation6 + $0x48] sm:$0xf]
    %v104 = vld [vmem:[#allocation6 + $0x4c] sm:$0xf]
    %v105 = vld [vmem:[#allocation6 + $0x50] sm:$0xf]
    %v106 = vld [vmem:[#allocation6 + $0x54] sm:$0xf]
    %v107 = vld [vmem:[#allocation6 + $0x58] sm:$0xf]
    %v108 = vld [vmem:[#allocation6 + $0x5c] sm:$0xf]
    %v109 = vld [vmem:[#allocation6 + $0x60] sm:$0xf]
    %v110 = vld [vmem:[#allocation6 + $0x64] sm:$0xf]
    %v111 = vld [vmem:[#allocation6 + $0x68] sm:$0xf]
    %v112 = vld [vmem:[#allocation6 + $0x6c] sm:$0xf]
    %v113 = vld [vmem:[#allocation6 + $0x70] sm:$0xf]
    %v114 = vld [vmem:[#allocation6 + $0x74] sm:$0xf]
    %v115 = vld [vmem:[#allocation6 + $0x78] sm:$0xf]
    %v116 = vld [vmem:[#allocation6 + $0x7c] sm:$0xf]
    %v117 = vld [vmem:[#allocation6 + $0x80] sm:$0xf]
    %v118 = vld [vmem:[#allocation6 + $0x84] sm:$0xf]
    %v119 = vld [vmem:[#allocation6 + $0x88] sm:$0xf]
    %v120 = vld [vmem:[#allocation6 + $0x8c] sm:$0xf]
    %v121 = vld [vmem:[#allocation6 + $0x90] sm:$0xf]
    %v122 = vld [vmem:[#allocation6 + $0x94] sm:$0xf]
    %v123 = vld [vmem:[#allocation6 + $0x98] sm:$0xf]
    %v124 = vld [vmem:[#allocation6 + $0x9c] sm:$0xf]
    %v125 = vld [vmem:[#allocation6 + $0xa0] sm:$0xf]
    %v126 = vld [vmem:[#allocation6 + $0xa4] sm:$0xf]
    %v127 = vld [vmem:[#allocation6 + $0xa8] sm:$0xf]
    %v128 = vld [vmem:[#allocation6 + $0xac] sm:$0xf]
    %v129 = vld [vmem:[#allocation6 + $0xb0] sm:$0xf]
    %v130 = vld [vmem:[#allocation6 + $0xb4] sm:$0xf]
    %v131 = vld [vmem:[#allocation6 + $0xb8] sm:$0xf]
    %v132 = vld [vmem:[#allocation6 + $0xbc] sm:$0xf]
    %v133 = vld [vmem:[#allocation6 + $0xc0] sm:$0xf]
    %v134 = vld [vmem:[#allocation6 + $0xc4] sm:$0xf]
    %v135 = vld [vmem:[#allocation6 + $0xc8] sm:$0xf]
    %v136 = vld [vmem:[#allocation6 + $0xcc] sm:$0xf]
    %v137 = vld [vmem:[#allocation6 + $0xd0] sm:$0xf]
    %v138 = vld [vmem:[#allocation6 + $0xd4] sm:$0xf]
    %v139 = vld [vmem:[#allocation6 + $0xd8] sm:$0xf]
    %v140 = vld [vmem:[#allocation6 + $0xdc] sm:$0xf]
    %v141 = vld [vmem:[#allocation6 + $0xe0] sm:$0xf]
    %v142 = vld [vmem:[#allocation6 + $0xe4] sm:$0xf]
    %v143 = vld [vmem:[#allocation6 + $0xe8] sm:$0xf]
    %v144 = vld [vmem:[#allocation6 + $0xec] sm:$0xf]
    %v145 = vld [vmem:[#allocation6 + $0xf0] sm:$0xf]
    %v146 = vld [vmem:[#allocation6 + $0xf4] sm:$0xf]
    %v147 = vld [vmem:[#allocation6 + $0xf8] sm:$0xf]
    %v148 = vld [vmem:[#allocation6 + $0xfc] sm:$0xf]
    %v149 = vld [vmem:[#allocation6 + $0x100] sm:$0xf]
    %v150 = vld [vmem:[#allocation6 + $0x104] sm:$0xf]
    %v151 = vld [vmem:[#allocation6 + $0x108] sm:$0xf]
    %v152 = vld [vmem:[#allocation6 + $0x10c] sm:$0xf]
    %v153 = vld [vmem:[#allocation6 + $0x110] sm:$0xf]
    %v154 = vld [vmem:[#allocation6 + $0x114] sm:$0xf]
    %v155 = vld [vmem:[#allocation6 + $0x118] sm:$0xf]
    %v156 = vld [vmem:[#allocation6 + $0x11c] sm:$0xf]
    %v157 = vld [vmem:[#allocation6 + $0x120] sm:$0xf]
    %v158 = vld [vmem:[#allocation6 + $0x124] sm:$0xf]
    %v159 = vld [vmem:[#allocation6 + $0x128] sm:$0xf]
    %v160 = vld [vmem:[#allocation6 + $0x12c] sm:$0xf]
    %v161 = vld [vmem:[#allocation6 + $0x130] sm:$0xf]
    %v162 = vld [vmem:[#allocation6 + $0x134] sm:$0xf]
    %v163 = vld [vmem:[#allocation6 + $0x138] sm:$0xf]
    %v164 = vld [vmem:[#allocation6 + $0x13c] sm:$0xf]
    %v165 = vld [vmem:[#allocation6 + $0x140] sm:$0xf]
    %v166 = vld [vmem:[#allocation6 + $0x144] sm:$0xf]
    %v167 = vld [vmem:[#allocation6 + $0x148] sm:$0xf]
    %v168 = vld [vmem:[#allocation6 + $0x14c] sm:$0xf]
    %v169 = vld [vmem:[#allocation6 + $0x150] sm:$0xf]
    %v170 = vld [vmem:[#allocation6 + $0x154] sm:$0xf]
    %v171 = vld [vmem:[#allocation6 + $0x158] sm:$0xf]
    %v172 = vld [vmem:[#allocation6 + $0x15c] sm:$0xf]
    %v173 = vld [vmem:[#allocation6 + $0x160] sm:$0xf]
    %v174 = vld [vmem:[#allocation6 + $0x164] sm:$0xf]
    %v175 = vld [vmem:[#allocation6 + $0x168] sm:$0xf]
    %v176 = vld [vmem:[#allocation6 + $0x16c] sm:$0xf]
    %v177 = vld [vmem:[#allocation6 + $0x170] sm:$0xf]
    %v178 = vld [vmem:[#allocation6 + $0x174] sm:$0xf]
    %v179 = vld [vmem:[#allocation6 + $0x178] sm:$0xf]
    %v180 = vld [vmem:[#allocation6 + $0x17c] sm:$0xf]
    %v181 = vld [vmem:[%s3] sm:$0x1]
    %v183 = vlaneseq
    %v184 = vshrl.u32 %v183, 7
    %v185 = vsub.s32 0, %v184
    %v186 = vrot.slane %v181, %v185
    %v284 = vunpack.c.l.b16 %v85
    %v285 = vunpack.c.l.b16 %v86
    %v286 = vunpack.c.l.b16 %v87
    %v287 = vunpack.c.l.b16 %v88
    %v288 = vunpack.c.l.b16 %v89
    %v289 = vunpack.c.l.b16 %v90
    %v290 = vunpack.c.l.b16 %v91
    %v291 = vunpack.c.l.b16 %v92
    %v292 = vunpack.c.l.b16 %v93
    %v293 = vunpack.c.l.b16 %v94
    %v294 = vunpack.c.l.b16 %v95
    %v295 = vunpack.c.l.b16 %v96
    %v296 = vunpack.c.l.b16 %v97
    %v297 = vunpack.c.l.b16 %v98
    %v298 = vunpack.c.l.b16 %v99
    %v299 = vunpack.c.l.b16 %v100
    %v300 = vunpack.c.l.b16 %v101
    %v301 = vunpack.c.l.b16 %v102
    %v302 = vunpack.c.l.b16 %v103
    %v303 = vunpack.c.l.b16 %v104
    %v304 = vunpack.c.l.b16 %v105
    %v305 = vunpack.c.l.b16 %v106
    %v306 = vunpack.c.l.b16 %v107
    %v307 = vunpack.c.l.b16 %v108
    %v308 = vunpack.c.l.b16 %v109
    %v309 = vunpack.c.l.b16 %v110
    %v310 = vunpack.c.l.b16 %v111
    %v311 = vunpack.c.l.b16 %v112
    %v312 = vunpack.c.l.b16 %v113
    %v313 = vunpack.c.l.b16 %v114
    %v314 = vunpack.c.l.b16 %v115
    %v315 = vunpack.c.l.b16 %v116
    %v316 = vunpack.c.l.b16 %v117
    %v317 = vunpack.c.l.b16 %v118
    %v318 = vunpack.c.l.b16 %v119
    %v319 = vunpack.c.l.b16 %v120
    %v320 = vunpack.c.l.b16 %v121
    %v321 = vunpack.c.l.b16 %v122
    %v322 = vunpack.c.l.b16 %v123
    %v323 = vunpack.c.l.b16 %v124
    %v324 = vunpack.c.l.b16 %v125
    %v325 = vunpack.c.l.b16 %v126
    %v326 = vunpack.c.l.b16 %v127
    %v327 = vunpack.c.l.b16 %v128
    %v328 = vunpack.c.l.b16 %v129
    %v329 = vunpack.c.l.b16 %v130
    %v330 = vunpack.c.l.b16 %v131
    %v331 = vunpack.c.l.b16 %v132
    %v332 = vunpack.c.l.b16 %v133
    %v333 = vunpack.c.l.b16 %v134
    %v334 = vunpack.c.l.b16 %v135
    %v335 = vunpack.c.l.b16 %v136
    %v336 = vunpack.c.l.b16 %v137
    %v337 = vunpack.c.l.b16 %v138
    %v338 = vunpack.c.l.b16 %v139
    %v339 = vunpack.c.l.b16 %v140
    %v340 = vunpack.c.l.b16 %v141
    %v341 = vunpack.c.l.b16 %v142
    %v342 = vunpack.c.l.b16 %v143
    %v343 = vunpack.c.l.b16 %v144
    %v344 = vunpack.c.l.b16 %v145
    %v345 = vunpack.c.l.b16 %v146
    %v346 = vunpack.c.l.b16 %v147
    %v347 = vunpack.c.l.b16 %v148
    %v348 = vunpack.c.l.b16 %v149
    %v349 = vunpack.c.l.b16 %v150
    %v350 = vunpack.c.l.b16 %v151
    %v351 = vunpack.c.l.b16 %v152
    %v352 = vunpack.c.l.b16 %v153
    %v353 = vunpack.c.l.b16 %v154
    %v354 = vunpack.c.l.b16 %v155
    %v355 = vunpack.c.l.b16 %v156
    %v356 = vunpack.c.l.b16 %v157
    %v357 = vunpack.c.l.b16 %v158
    %v358 = vunpack.c.l.b16 %v159
    %v359 = vunpack.c.l.b16 %v160
    %v360 = vunpack.c.l.b16 %v161
    %v361 = vunpack.c.l.b16 %v162
    %v362 = vunpack.c.l.b16 %v163
    %v363 = vunpack.c.l.b16 %v164
    %v364 = vunpack.c.l.b16 %v165
    %v365 = vunpack.c.l.b16 %v166
    %v366 = vunpack.c.l.b16 %v167
    %v367 = vunpack.c.l.b16 %v168
    %v368 = vunpack.c.l.b16 %v169
    %v369 = vunpack.c.l.b16 %v170
    %v370 = vunpack.c.l.b16 %v171
    %v371 = vunpack.c.l.b16 %v172
    %v372 = vunpack.c.l.b16 %v173
    %v373 = vunpack.c.l.b16 %v174
    %v374 = vunpack.c.l.b16 %v175
    %v375 = vunpack.c.l.b16 %v176
    %v376 = vunpack.c.l.b16 %v177
    %v377 = vunpack.c.l.b16 %v178
    %v378 = vunpack.c.l.b16 %v179
    %v379 = vunpack.c.l.b16 %v180
    %v380 = vpack.c.b16 %v285, %v284
    %v381 = vpack.c.b16 %v287, %v286
    %v382 = vpack.c.b16 %v289, %v288
    %v383 = vpack.c.b16 %v291, %v290
    %v384 = vpack.c.b16 %v293, %v292
    %v385 = vpack.c.b16 %v295, %v294
    %v386 = vpack.c.b16 %v297, %v296
    %v387 = vpack.c.b16 %v299, %v298
    %v388 = vpack.c.b16 %v301, %v300
    %v389 = vpack.c.b16 %v303, %v302
    %v390 = vpack.c.b16 %v305, %v304
    %v391 = vpack.c.b16 %v307, %v306
    %v392 = vpack.c.b16 %v309, %v308
    %v393 = vpack.c.b16 %v311, %v310
    %v394 = vpack.c.b16 %v313, %v312
    %v395 = vpack.c.b16 %v315, %v314
    %v396 = vpack.c.b16 %v317, %v316
    %v397 = vpack.c.b16 %v319, %v318
    %v398 = vpack.c.b16 %v321, %v320
    %v399 = vpack.c.b16 %v323, %v322
    %v400 = vpack.c.b16 %v325, %v324
    %v401 = vpack.c.b16 %v327, %v326
    %v402 = vpack.c.b16 %v329, %v328
    %v403 = vpack.c.b16 %v331, %v330
    %v404 = vpack.c.b16 %v333, %v332
    %v405 = vpack.c.b16 %v335, %v334
    %v406 = vpack.c.b16 %v337, %v336
    %v407 = vpack.c.b16 %v339, %v338
    %v408 = vpack.c.b16 %v341, %v340
    %v409 = vpack.c.b16 %v343, %v342
    %v410 = vpack.c.b16 %v345, %v344
    %v411 = vpack.c.b16 %v347, %v346
    %v412 = vpack.c.b16 %v349, %v348
    %v413 = vpack.c.b16 %v351, %v350
    %v414 = vpack.c.b16 %v353, %v352
    %v415 = vpack.c.b16 %v355, %v354
    %v416 = vpack.c.b16 %v357, %v356
    %v417 = vpack.c.b16 %v359, %v358
    %v418 = vpack.c.b16 %v361, %v360
    %v419 = vpack.c.b16 %v363, %v362
    %v420 = vpack.c.b16 %v365, %v364
    %v421 = vpack.c.b16 %v367, %v366
    %v422 = vpack.c.b16 %v369, %v368
    %v423 = vpack.c.b16 %v371, %v370
    %v424 = vpack.c.b16 %v373, %v372
    %v425 = vpack.c.b16 %v375, %v374
    %v426 = vpack.c.b16 %v377, %v376
    %v427 = vpack.c.b16 %v379, %v378
    %476 = vmatprep.subr.bf16.mxu0 0
    %477 = vmatpush1.bf16.msra.mxu0 %v380
    %478 = vmatprep.subr.bf16.mxu0 0
    %479 = vmatpush1.bf16.msra.mxu0 %v381
    %480 = vmatprep.subr.bf16.mxu0 0
    %481 = vmatpush1.bf16.msra.mxu0 %v382
    %482 = vmatprep.subr.bf16.mxu0 0
    %483 = vmatpush1.bf16.msra.mxu0 %v383
    %484 = vmatprep.subr.bf16.mxu0 0
    %485 = vmatpush1.bf16.msra.mxu0 %v384
    %486 = vmatprep.subr.bf16.mxu0 0
    %487 = vmatpush1.bf16.msra.mxu0 %v385
    %488 = vmatprep.subr.bf16.mxu0 0
    %489 = vmatpush1.bf16.msra.mxu0 %v386
    %490 = vmatprep.subr.bf16.mxu0 0
    %491 = vmatpush1.bf16.msra.mxu0 %v387
    %492 = vmatprep.subr.bf16.mxu0 0
    %493 = vmatpush1.bf16.msra.mxu0 %v388
    %494 = vmatprep.subr.bf16.mxu0 0
    %495 = vmatpush1.bf16.msra.mxu0 %v389
    %496 = vmatprep.subr.bf16.mxu0 0
    %497 = vmatpush1.bf16.msra.mxu0 %v390
    %498 = vmatprep.subr.bf16.mxu0 0
    %499 = vmatpush1.bf16.msra.mxu0 %v391
    %500 = vmatprep.subr.bf16.mxu0 0
    %501 = vmatpush1.bf16.msra.mxu0 %v392
    %502 = vmatprep.subr.bf16.mxu0 0
    %503 = vmatpush1.bf16.msra.mxu0 %v393
    %504 = vmatprep.subr.bf16.mxu0 0
    %505 = vmatpush1.bf16.msra.mxu0 %v394
    %506 = vmatprep.subr.bf16.mxu0 0
    %507 = vmatpush1.bf16.msra.mxu0 %v395
    %508 = vmatprep.mubr.bf16.mxu0 %v79
    %509 = vmatmul.mubr.bf16.gmra.mrb[0].mxu0 %v78
    %v510 = vpop.f32.mrb[0].mxu0
    %v511 = vadd.f32 %v186, %v510
    %v512 = vpop.f32.mrb[0].mxu0
    %v513 = vpop.f32.mrb[0].mxu0
    %v514 = vpop.f32.mrb[0].mxu0
    %515 = vdwg.mxu0
    %516 = vmatprep.subr.bf16.mxu0 0
    %517 = vmatpush1.bf16.msra.mxu0 %v396
    %518 = vmatprep.subr.bf16.mxu0 0
    %519 = vmatpush1.bf16.msra.mxu0 %v397
    %520 = vmatprep.subr.bf16.mxu0 0
    %521 = vmatpush1.bf16.msra.mxu0 %v398
    %522 = vmatprep.subr.bf16.mxu0 0
    %523 = vmatpush1.bf16.msra.mxu0 %v399
    %524 = vmatprep.subr.bf16.mxu0 0
    %525 = vmatpush1.bf16.msra.mxu0 %v400
    %526 = vmatprep.subr.bf16.mxu0 0
    %527 = vmatpush1.bf16.msra.mxu0 %v401
    %528 = vmatprep.subr.bf16.mxu0 0
    %529 = vmatpush1.bf16.msra.mxu0 %v402
    %530 = vmatprep.subr.bf16.mxu0 0
    %531 = vmatpush1.bf16.msra.mxu0 %v403
    %532 = vmatprep.subr.bf16.mxu0 0
    %533 = vmatpush1.bf16.msra.mxu0 %v404
    %534 = vmatprep.subr.bf16.mxu0 0
    %535 = vmatpush1.bf16.msra.mxu0 %v405
    %536 = vmatprep.subr.bf16.mxu0 0
    %537 = vmatpush1.bf16.msra.mxu0 %v406
    %538 = vmatprep.subr.bf16.mxu0 0
    %539 = vmatpush1.bf16.msra.mxu0 %v407
    %540 = vmatprep.subr.bf16.mxu0 0
    %541 = vmatpush1.bf16.msra.mxu0 %v408
    %542 = vmatprep.subr.bf16.mxu0 0
    %543 = vmatpush1.bf16.msra.mxu0 %v409
    %544 = vmatprep.subr.bf16.mxu0 0
    %545 = vmatpush1.bf16.msra.mxu0 %v410
    %546 = vmatprep.subr.bf16.mxu0 0
    %547 = vmatpush1.bf16.msra.mxu0 %v411
    %548 = vmatprep.mubr.bf16.mxu0 %v81
    %549 = vmatmul.mubr.bf16.gmra.mrb[0].mxu0 %v80
    %v550 = vpop.f32.mrb[0].mxu0
    %v551 = vadd.f32 %v511, %v550
    %v552 = vpop.f32.mrb[0].mxu0
    %v553 = vpop.f32.mrb[0].mxu0
    %v554 = vpop.f32.mrb[0].mxu0
    %555 = vdwg.mxu0
    %556 = vmatprep.subr.bf16.mxu0 0
    %557 = vmatpush1.bf16.msra.mxu0 %v412
    %558 = vmatprep.subr.bf16.mxu0 0
    %559 = vmatpush1.bf16.msra.mxu0 %v413
    %560 = vmatprep.subr.bf16.mxu0 0
    %561 = vmatpush1.bf16.msra.mxu0 %v414
    %562 = vmatprep.subr.bf16.mxu0 0
    %563 = vmatpush1.bf16.msra.mxu0 %v415
    %564 = vmatprep.subr.bf16.mxu0 0
    %565 = vmatpush1.bf16.msra.mxu0 %v416
    %566 = vmatprep.subr.bf16.mxu0 0
    %567 = vmatpush1.bf16.msra.mxu0 %v417
    %568 = vmatprep.subr.bf16.mxu0 0
    %569 = vmatpush1.bf16.msra.mxu0 %v418
    %570 = vmatprep.subr.bf16.mxu0 0
    %571 = vmatpush1.bf16.msra.mxu0 %v419
    %572 = vmatprep.subr.bf16.mxu0 0
    %573 = vmatpush1.bf16.msra.mxu0 %v420
    %574 = vmatprep.subr.bf16.mxu0 0
    %575 = vmatpush1.bf16.msra.mxu0 %v421
    %576 = vmatprep.subr.bf16.mxu0 0
    %577 = vmatpush1.bf16.msra.mxu0 %v422
    %578 = vmatprep.subr.bf16.mxu0 0
    %579 = vmatpush1.bf16.msra.mxu0 %v423
    %580 = vmatprep.subr.bf16.mxu0 0
    %581 = vmatpush1.bf16.msra.mxu0 %v424
    %582 = vmatprep.subr.bf16.mxu0 0
    %583 = vmatpush1.bf16.msra.mxu0 %v425
    %584 = vmatprep.subr.bf16.mxu0 0
    %585 = vmatpush1.bf16.msra.mxu0 %v426
    %586 = vmatprep.subr.bf16.mxu0 0
    %587 = vmatpush1.bf16.msra.mxu0 %v427
    %588 = vmatprep.mubr.bf16.mxu0 %v83
    %589 = vmatmul.mubr.bf16.gmra.mrb[0].mxu0 %v82
    %v590 = vpop.f32.mrb[0].mxu0
    %v591 = vadd.f32 %v551, %v590
    %v592 = vpop.f32.mrb[0].mxu0
    %v593 = vpop.f32.mrb[0].mxu0
    %v594 = vpop.f32.mrb[0].mxu0
    %595 = vdwg.mxu0
    %s596 = scalar_lea.vmem [#allocation2], %s84
    %597 = vst [vmem:[%s596] sm:$0xff] %v591
    %p598 = scmp.eq.s32.totalorder 0, 0
    // Predicated region
    $region38: #{model_forward.1} parent=1 // pred_check
      %p599 = pneg %p598
    $region39: #{model_forward.1} parent=1 // pred_check_branch
      %601 = sbr.rel (%p599) target = $region41
    $region40: #{model_forward.1} parent=1 // pred_region
      %602 = vst [vmem:[#allocation3] sm:$0xff] 0.0
      %v603 = vlaneseq
      %v604 = vshrl.u32 %v603, 7
      loop: start=0, step=1, limit=2
      $region42: #{model_forward.1} parent=40 // loop_pre_header
        _
      $region43: #{model_forward.1} parent=40 // loop_header
        %s606 = sphi 0, %s610
        %p607 = scmp.ge.s32.totalorder %s606, 2
      $region44: #{model_forward.1} parent=40 // loop_header_branch
        %609 = sbr.rel (%p607) target = $region48
      $region45: #{model_forward.1} parent=40 // loop_body
        %s611 = sld [smem:[#allocation5 + %s606]]
        %s612 = sadd.s32 %s606, 1
        %s613 = sld [smem:[#allocation5 + %s612]]
        %s614 = ssub.s32 %s613, %s611
        %s615 = scalar_lea.vmem [#allocation2], %s611
        %v616 = vld [vmem:[%s615] sm:$0xff]
        %v617 = vstv %s614
        %vm618 = vcmp.lt.s32.totalorder %v604, %v617
        %v619 = vsel %vm618, 1, 0
        %vm620 = vcmp.eq.s32.totalorder %v619, 1
        %v621 = vsel %vm620, %v616, -1e+30
        %v622 = vrot.slane %v621, 4
        %v623 = vmax.f32 %v621, %v622
        %v624 = vrot.slane %v623, 2
        %v625 = vmax.f32 %v623, %v624
        %v626 = vrot.slane %v625, 1
        %v627 = vmax.f32 %v625, %v626
        %v628 = vsub.f32 %v621, %v627
        %v629 = vmul.f32 %v628, 1.442695
        %v630 = vpow.pop %v629
        %v631 = vrot.slane %v630, 4
        %v632 = vadd.f32 %v630, %v631
        %v633 = vrot.slane %v632, 2
        %v634 = vadd.f32 %v632, %v633
        %v635 = vrot.slane %v634, 1
        %v636 = vadd.f32 %v634, %v635
        %v637 = vsel %vm620, %v616, 0.0
        %v638 = vmul.f32 %v630, %v637
        %v639 = vrot.slane %v638, 4
        %v640 = vadd.f32 %v638, %v639
        %v641 = vrot.slane %v640, 2
        %v642 = vadd.f32 %v640, %v641
        %v643 = vrot.slane %v642, 1
        %v644 = vadd.f32 %v642, %v643
        %v645 = vrcp.pop %v636
        %v646 = vmul.f32 %v644, %v645
        %s647 = scalar_lea.vmem [#allocation3], %s606
        %648 = vst [vmem:[%s647] sm:$0x1] %v646
      $region46: #{model_forward.1} parent=40 // loop_footer
        %s610 = sadd.s32 1, %s606
      $region47: #{model_forward.1} parent=40 // loop_footer_branch
        %605 = sbr.rel target = $region43
      $region48: #{model_forward.1} parent=40 // loop_exit
        _
      %v649 = vld [vmem:[#allocation3] sm:$0xff]
      %v650 = vld [vmem:[%s4] sm:$0xff]
      %v651 = vld [vmem:[%s4 + $0x8] sm:$0xff]
      %v652 = vld [vmem:[%s4 + $0x10] sm:$0xff]
      %v653 = vld [vmem:[#allocation9] sm:$0xf]
      %v654 = vld [vmem:[#allocation9 + $0x4] sm:$0xf]
      %v655 = vld [vmem:[#allocation9 + $0x8] sm:$0xf]
      %v656 = vld [vmem:[#allocation9 + $0xc] sm:$0xf]
      %v657 = vld [vmem:[#allocation9 + $0x10] sm:$0xf]
      %v658 = vld [vmem:[#allocation9 + $0x14] sm:$0xf]
      %v659 = vld [vmem:[#allocation9 + $0x18] sm:$0xf]
      %v660 = vld [vmem:[#allocation9 + $0x1c] sm:$0xf]
      %v661 = vld [vmem:[#allocation9 + $0x20] sm:$0xf]
      %v662 = vld [vmem:[#allocation9 + $0x24] sm:$0xf]
      %v663 = vld [vmem:[#allocation9 + $0x28] sm:$0xf]
      %v664 = vld [vmem:[#allocation9 + $0x2c] sm:$0xf]
      %v665 = vld [vmem:[#allocation9 + $0x30] sm:$0xf]
      %v666 = vld [vmem:[#allocation9 + $0x34] sm:$0xf]
      %v667 = vld [vmem:[#allocation9 + $0x38] sm:$0xf]
      %v668 = vld [vmem:[#allocation9 + $0x3c] sm:$0xf]
      %v669 = vld [vmem:[#allocation9 + $0x40] sm:$0xf]
      %v670 = vld [vmem:[#allocation9 + $0x44] sm:$0xf]
      %v671 = vld [vmem:[#allocation9 + $0x48] sm:$0xf]
      %v672 = vld [vmem:[#allocation9 + $0x4c] sm:$0xf]
      %v673 = vld [vmem:[#allocation9 + $0x50] sm:$0xf]
      %v674 = vld [vmem:[#allocation9 + $0x54] sm:$0xf]
      %v675 = vld [vmem:[#allocation9 + $0x58] sm:$0xf]
      %v676 = vld [vmem:[#allocation9 + $0x5c] sm:$0xf]
      %v677 = vld [vmem:[#allocation9 + $0x60] sm:$0xf]
      %v678 = vld [vmem:[#allocation9 + $0x64] sm:$0xf]
      %v679 = vld [vmem:[#allocation9 + $0x68] sm:$0xf]
      %v680 = vld [vmem:[#allocation9 + $0x6c] sm:$0xf]
      %v681 = vld [vmem:[#allocation9 + $0x70] sm:$0xf]
      %v682 = vld [vmem:[#allocation9 + $0x74] sm:$0xf]
      %v683 = vld [vmem:[#allocation9 + $0x78] sm:$0xf]
      %v684 = vld [vmem:[#allocation9 + $0x7c] sm:$0xf]
      %v685 = vld [vmem:[#allocation9 + $0x80] sm:$0xf]
      %v686 = vld [vmem:[#allocation9 + $0x84] sm:$0xf]
      %v687 = vld [vmem:[#allocation9 + $0x88] sm:$0xf]
      %v688 = vld [vmem:[#allocation9 + $0x8c] sm:$0xf]
      %v689 = vld [vmem:[#allocation9 + $0x90] sm:$0xf]
      %v690 = vld [vmem:[#allocation9 + $0x94] sm:$0xf]
      %v691 = vld [vmem:[#allocation9 + $0x98] sm:$0xf]
      %v692 = vld [vmem:[#allocation9 + $0x9c] sm:$0xf]
      %v693 = vld [vmem:[#allocation9 + $0xa0] sm:$0xf]
      %v694 = vld [vmem:[#allocation9 + $0xa4] sm:$0xf]
      %v695 = vld [vmem:[#allocation9 + $0xa8] sm:$0xf]
      %v696 = vld [vmem:[#allocation9 + $0xac] sm:$0xf]
      %v697 = vld [vmem:[#allocation9 + $0xb0] sm:$0xf]
      %v698 = vld [vmem:[#allocation9 + $0xb4] sm:$0xf]
      %v699 = vld [vmem:[#allocation9 + $0xb8] sm:$0xf]
      %v700 = vld [vmem:[#allocation9 + $0xbc] sm:$0xf]
      %v701 = vld [vmem:[#allocation9 + $0xc0] sm:$0xf]
      %v702 = vld [vmem:[#allocation9 + $0xc4] sm:$0xf]
      %v703 = vld [vmem:[#allocation9 + $0xc8] sm:$0xf]
      %v704 = vld [vmem:[#allocation9 + $0xcc] sm:$0xf]
      %v705 = vld [vmem:[#allocation9 + $0xd0] sm:$0xf]
      %v706 = vld [vmem:[#allocation9 + $0xd4] sm:$0xf]
      %v707 = vld [vmem:[#allocation9 + $0xd8] sm:$0xf]
      %v708 = vld [vmem:[#allocation9 + $0xdc] sm:$0xf]
      %v709 = vld [vmem:[#allocation9 + $0xe0] sm:$0xf]
      %v710 = vld [vmem:[#allocation9 + $0xe4] sm:$0xf]
      %v711 = vld [vmem:[#allocation9 + $0xe8] sm:$0xf]
      %v712 = vld [vmem:[#allocation9 + $0xec] sm:$0xf]
      %v713 = vld [vmem:[#allocation9 + $0xf0] sm:$0xf]
      %v714 = vld [vmem:[#allocation9 + $0xf4] sm:$0xf]
      %v715 = vld [vmem:[#allocation9 + $0xf8] sm:$0xf]
      %v716 = vld [vmem:[#allocation9 + $0xfc] sm:$0xf]
      %v717 = vld [vmem:[#allocation9 + $0x100] sm:$0xf]
      %v718 = vld [vmem:[#allocation9 + $0x104] sm:$0xf]
      %v719 = vld [vmem:[#allocation9 + $0x108] sm:$0xf]
      %v720 = vld [vmem:[#allocation9 + $0x10c] sm:$0xf]
      %v721 = vld [vmem:[#allocation9 + $0x110] sm:$0xf]
      %v722 = vld [vmem:[#allocation9 + $0x114] sm:$0xf]
      %v723 = vld [vmem:[#allocation9 + $0x118] sm:$0xf]
      %v724 = vld [vmem:[#allocation9 + $0x11c] sm:$0xf]
      %v725 = vld [vmem:[#allocation9 + $0x120] sm:$0xf]
      %v726 = vld [vmem:[#allocation9 + $0x124] sm:$0xf]
      %v727 = vld [vmem:[#allocation9 + $0x128] sm:$0xf]
      %v728 = vld [vmem:[#allocation9 + $0x12c] sm:$0xf]
      %v729 = vld [vmem:[#allocation9 + $0x130] sm:$0xf]
      %v730 = vld [vmem:[#allocation9 + $0x134] sm:$0xf]
      %v731 = vld [vmem:[#allocation9 + $0x138] sm:$0xf]
      %v732 = vld [vmem:[#allocation9 + $0x13c] sm:$0xf]
      %v733 = vld [vmem:[#allocation9 + $0x140] sm:$0xf]
      %v734 = vld [vmem:[#allocation9 + $0x144] sm:$0xf]
      %v735 = vld [vmem:[#allocation9 + $0x148] sm:$0xf]
      %v736 = vld [vmem:[#allocation9 + $0x14c] sm:$0xf]
      %v737 = vld [vmem:[#allocation9 + $0x150] sm:$0xf]
      %v738 = vld [vmem:[#allocation9 + $0x154] sm:$0xf]
      %v739 = vld [vmem:[#allocation9 + $0x158] sm:$0xf]
      %v740 = vld [vmem:[#allocation9 + $0x15c] sm:$0xf]
      %v741 = vld [vmem:[#allocation9 + $0x160] sm:$0xf]
      %v742 = vld [vmem:[#allocation9 + $0x164] sm:$0xf]
      %v743 = vld [vmem:[#allocation9 + $0x168] sm:$0xf]
      %v744 = vld [vmem:[#allocation9 + $0x16c] sm:$0xf]
      %v745 = vld [vmem:[#allocation9 + $0x170] sm:$0xf]
      %v746 = vld [vmem:[#allocation9 + $0x174] sm:$0xf]
      %v747 = vld [vmem:[#allocation9 + $0x178] sm:$0xf]
      %v748 = vld [vmem:[#allocation9 + $0x17c] sm:$0xf]
      %v749 = vld [vmem:[%s6] sm:$0x1]
      %v751 = vlaneseq
      %v752 = vshrl.u32 %v751, 7
      %v753 = vsub.s32 0, %v752
      %v754 = vrot.slane %v749, %v753
      %v759 = vunpack.c.l.b16 %v650
      %v760 = vunpack.c.h.b16 %v650
      %v761 = vunpack.c.l.b16 %v651
      %v762 = vunpack.c.h.b16 %v651
      %v763 = vunpack.c.l.b16 %v652
      %v764 = vunpack.c.h.b16 %v652
      %v765 = vpack.c.b16 %v759, %v759
      %v766 = vpack.c.b16 %v760, %v760
      %v767 = vpack.c.b16 %v761, %v761
      %v768 = vpack.c.b16 %v762, %v762
      %v769 = vpack.c.b16 %v763, %v763
      %v770 = vpack.c.b16 %v764, %v764
      %v873 = vunpack.c.l.b16 %v653
      %v874 = vunpack.c.l.b16 %v654
      %v875 = vunpack.c.l.b16 %v655
      %v876 = vunpack.c.l.b16 %v656
      %v877 = vunpack.c.l.b16 %v657
      %v878 = vunpack.c.l.b16 %v658
      %v879 = vunpack.c.l.b16 %v659
      %v880 = vunpack.c.l.b16 %v660
      %v881 = vunpack.c.l.b16 %v661
      %v882 = vunpack.c.l.b16 %v662
      %v883 = vunpack.c.l.b16 %v663
      %v884 = vunpack.c.l.b16 %v664
      %v885 = vunpack.c.l.b16 %v665
      %v886 = vunpack.c.l.b16 %v666
      %v887 = vunpack.c.l.b16 %v667
      %v888 = vunpack.c.l.b16 %v668
      %v889 = vunpack.c.l.b16 %v669
      %v890 = vunpack.c.l.b16 %v670
      %v891 = vunpack.c.l.b16 %v671
      %v892 = vunpack.c.l.b16 %v672
      %v893 = vunpack.c.l.b16 %v673
      %v894 = vunpack.c.l.b16 %v674
      %v895 = vunpack.c.l.b16 %v675
      %v896 = vunpack.c.l.b16 %v676
      %v897 = vunpack.c.l.b16 %v677
      %v898 = vunpack.c.l.b16 %v678
      %v899 = vunpack.c.l.b16 %v679
      %v900 = vunpack.c.l.b16 %v680
      %v901 = vunpack.c.l.b16 %v681
      %v902 = vunpack.c.l.b16 %v682
      %v903 = vunpack.c.l.b16 %v683
      %v904 = vunpack.c.l.b16 %v684
      %v905 = vunpack.c.l.b16 %v685
      %v906 = vunpack.c.l.b16 %v686
      %v907 = vunpack.c.l.b16 %v687
      %v908 = vunpack.c.l.b16 %v688
      %v909 = vunpack.c.l.b16 %v689
      %v910 = vunpack.c.l.b16 %v690
      %v911 = vunpack.c.l.b16 %v691
      %v912 = vunpack.c.l.b16 %v692
      %v913 = vunpack.c.l.b16 %v693
      %v914 = vunpack.c.l.b16 %v694
      %v915 = vunpack.c.l.b16 %v695
      %v916 = vunpack.c.l.b16 %v696
      %v917 = vunpack.c.l.b16 %v697
      %v918 = vunpack.c.l.b16 %v698
      %v919 = vunpack.c.l.b16 %v699
      %v920 = vunpack.c.l.b16 %v700
      %v921 = vunpack.c.l.b16 %v701
      %v922 = vunpack.c.l.b16 %v702
      %v923 = vunpack.c.l.b16 %v703
      %v924 = vunpack.c.l.b16 %v704
      %v925 = vunpack.c.l.b16 %v705
      %v926 = vunpack.c.l.b16 %v706
      %v927 = vunpack.c.l.b16 %v707
      %v928 = vunpack.c.l.b16 %v708
      %v929 = vunpack.c.l.b16 %v709
      %v930 = vunpack.c.l.b16 %v710
      %v931 = vunpack.c.l.b16 %v711
      %v932 = vunpack.c.l.b16 %v712
      %v933 = vunpack.c.l.b16 %v713
      %v934 = vunpack.c.l.b16 %v714
      %v935 = vunpack.c.l.b16 %v715
      %v936 = vunpack.c.l.b16 %v716
      %v937 = vunpack.c.l.b16 %v717
      %v938 = vunpack.c.l.b16 %v718
      %v939 = vunpack.c.l.b16 %v719
      %v940 = vunpack.c.l.b16 %v720
      %v941 = vunpack.c.l.b16 %v721
      %v942 = vunpack.c.l.b16 %v722
      %v943 = vunpack.c.l.b16 %v723
      %v944 = vunpack.c.l.b16 %v724
      %v945 = vunpack.c.l.b16 %v725
      %v946 = vunpack.c.l.b16 %v726
      %v947 = vunpack.c.l.b16 %v727
      %v948 = vunpack.c.l.b16 %v728
      %v949 = vunpack.c.l.b16 %v729
      %v950 = vunpack.c.l.b16 %v730
      %v951 = vunpack.c.l.b16 %v731
      %v952 = vunpack.c.l.b16 %v732
      %v953 = vunpack.c.l.b16 %v733
      %v954 = vunpack.c.l.b16 %v734
      %v955 = vunpack.c.l.b16 %v735
      %v956 = vunpack.c.l.b16 %v736
      %v957 = vunpack.c.l.b16 %v737
      %v958 = vunpack.c.l.b16 %v738
      %v959 = vunpack.c.l.b16 %v739
      %v960 = vunpack.c.l.b16 %v740
      %v961 = vunpack.c.l.b16 %v741
      %v962 = vunpack.c.l.b16 %v742
      %v963 = vunpack.c.l.b16 %v743
      %v964 = vunpack.c.l.b16 %v744
      %v965 = vunpack.c.l.b16 %v745
      %v966 = vunpack.c.l.b16 %v746
      %v967 = vunpack.c.l.b16 %v747
      %v968 = vunpack.c.l.b16 %v748
      %v969 = vpack.c.b16 %v874, %v873
      %v970 = vpack.c.b16 %v876, %v875
      %v971 = vpack.c.b16 %v878, %v877
      %v972 = vpack.c.b16 %v880, %v879
      %v973 = vpack.c.b16 %v882, %v881
      %v974 = vpack.c.b16 %v884, %v883
      %v975 = vpack.c.b16 %v886, %v885
      %v976 = vpack.c.b16 %v888, %v887
      %v977 = vpack.c.b16 %v890, %v889
      %v978 = vpack.c.b16 %v892, %v891
      %v979 = vpack.c.b16 %v894, %v893
      %v980 = vpack.c.b16 %v896, %v895
      %v981 = vpack.c.b16 %v898, %v897
      %v982 = vpack.c.b16 %v900, %v899
      %v983 = vpack.c.b16 %v902, %v901
      %v984 = vpack.c.b16 %v904, %v903
      %v985 = vpack.c.b16 %v906, %v905
      %v986 = vpack.c.b16 %v908, %v907
      %v987 = vpack.c.b16 %v910, %v909
      %v988 = vpack.c.b16 %v912, %v911
      %v989 = vpack.c.b16 %v914, %v913
      %v990 = vpack.c.b16 %v916, %v915
      %v991 = vpack.c.b16 %v918, %v917
      %v992 = vpack.c.b16 %v920, %v919
      %v993 = vpack.c.b16 %v922, %v921
      %v994 = vpack.c.b16 %v924, %v923
      %v995 = vpack.c.b16 %v926, %v925
      %v996 = vpack.c.b16 %v928, %v927
      %v997 = vpack.c.b16 %v930, %v929
      %v998 = vpack.c.b16 %v932, %v931
      %v999 = vpack.c.b16 %v934, %v933
      %v1000 = vpack.c.b16 %v936, %v935
      %v1001 = vpack.c.b16 %v938, %v937
      %v1002 = vpack.c.b16 %v940, %v939
      %v1003 = vpack.c.b16 %v942, %v941
      %v1004 = vpack.c.b16 %v944, %v943
      %v1005 = vpack.c.b16 %v946, %v945
      %v1006 = vpack.c.b16 %v948, %v947
      %v1007 = vpack.c.b16 %v950, %v949
      %v1008 = vpack.c.b16 %v952, %v951
      %v1009 = vpack.c.b16 %v954, %v953
      %v1010 = vpack.c.b16 %v956, %v955
      %v1011 = vpack.c.b16 %v958, %v957
      %v1012 = vpack.c.b16 %v960, %v959
      %v1013 = vpack.c.b16 %v962, %v961
      %v1014 = vpack.c.b16 %v964, %v963
      %v1015 = vpack.c.b16 %v966, %v965
      %v1016 = vpack.c.b16 %v968, %v967
      %1065 = vmatprep.subr.bf16.mxu0 0
      %1066 = vmatpush1.bf16.msra.mxu0 %v969
      %1067 = vmatprep.subr.bf16.mxu0 0
      %1068 = vmatpush1.bf16.msra.mxu0 %v970
      %1069 = vmatprep.subr.bf16.mxu0 0
      %1070 = vmatpush1.bf16.msra.mxu0 %v971
      %1071 = vmatprep.subr.bf16.mxu0 0
      %1072 = vmatpush1.bf16.msra.mxu0 %v972
      %1073 = vmatprep.subr.bf16.mxu0 0
      %1074 = vmatpush1.bf16.msra.mxu0 %v973
      %1075 = vmatprep.subr.bf16.mxu0 0
      %1076 = vmatpush1.bf16.msra.mxu0 %v974
      %1077 = vmatprep.subr.bf16.mxu0 0
      %1078 = vmatpush1.bf16.msra.mxu0 %v975
      %1079 = vmatprep.subr.bf16.mxu0 0
      %1080 = vmatpush1.bf16.msra.mxu0 %v976
      %1081 = vmatprep.subr.bf16.mxu0 0
      %1082 = vmatpush1.bf16.msra.mxu0 %v977
      %1083 = vmatprep.subr.bf16.mxu0 0
      %1084 = vmatpush1.bf16.msra.mxu0 %v978
      %1085 = vmatprep.subr.bf16.mxu0 0
      %1086 = vmatpush1.bf16.msra.mxu0 %v979
      %1087 = vmatprep.subr.bf16.mxu0 0
      %1088 = vmatpush1.bf16.msra.mxu0 %v980
      %1089 = vmatprep.subr.bf16.mxu0 0
      %1090 = vmatpush1.bf16.msra.mxu0 %v981
      %1091 = vmatprep.subr.bf16.mxu0 0
      %1092 = vmatpush1.bf16.msra.mxu0 %v982
      %1093 = vmatprep.subr.bf16.mxu0 0
      %1094 = vmatpush1.bf16.msra.mxu0 %v983
      %1095 = vmatprep.subr.bf16.mxu0 0
      %1096 = vmatpush1.bf16.msra.mxu0 %v984
      %1097 = vmatprep.mubr.bf16.mxu0 %v766
      %1098 = vmatmul.mubr.bf16.gmra.mrb[0].mxu0 %v765
      %v1099 = vpop.f32.mrb[0].mxu0
      %v1100 = vadd.f32 %v754, %v1099
      %v1101 = vpop.f32.mrb[0].mxu0
      %v1102 = vpop.f32.mrb[0].mxu0
      %v1103 = vpop.f32.mrb[0].mxu0
      %1104 = vdwg.mxu0
      %1105 = vmatprep.subr.bf16.mxu0 0
      %1106 = vmatpush1.bf16.msra.mxu0 %v985
      %1107 = vmatprep.subr.bf16.mxu0 0
      %1108 = vmatpush1.bf16.msra.mxu0 %v986
      %1109 = vmatprep.subr.bf16.mxu0 0
      %1110 = vmatpush1.bf16.msra.mxu0 %v987
      %1111 = vmatprep.subr.bf16.mxu0 0
      %1112 = vmatpush1.bf16.msra.mxu0 %v988
      %1113 = vmatprep.subr.bf16.mxu0 0
      %1114 = vmatpush1.bf16.msra.mxu0 %v989
      %1115 = vmatprep.subr.bf16.mxu0 0
      %1116 = vmatpush1.bf16.msra.mxu0 %v990
      %1117 = vmatprep.subr.bf16.mxu0 0
      %1118 = vmatpush1.bf16.msra.mxu0 %v991
      %1119 = vmatprep.subr.bf16.mxu0 0
      %1120 = vmatpush1.bf16.msra.mxu0 %v992
      %1121 = vmatprep.subr.bf16.mxu0 0
      %1122 = vmatpush1.bf16.msra.mxu0 %v993
      %1123 = vmatprep.subr.bf16.mxu0 0
      %1124 = vmatpush1.bf16.msra.mxu0 %v994
      %1125 = vmatprep.subr.bf16.mxu0 0
      %1126 = vmatpush1.bf16.msra.mxu0 %v995
      %1127 = vmatprep.subr.bf16.mxu0 0
      %1128 = vmatpush1.bf16.msra.mxu0 %v996
      %1129 = vmatprep.subr.bf16.mxu0 0
      %1130 = vmatpush1.bf16.msra.mxu0 %v997
      %1131 = vmatprep.subr.bf16.mxu0 0
      %1132 = vmatpush1.bf16.msra.mxu0 %v998
      %1133 = vmatprep.subr.bf16.mxu0 0
      %1134 = vmatpush1.bf16.msra.mxu0 %v999
      %1135 = vmatprep.subr.bf16.mxu0 0
      %1136 = vmatpush1.bf16.msra.mxu0 %v1000
      %1137 = vmatprep.mubr.bf16.mxu0 %v768
      %1138 = vmatmul.mubr.bf16.gmra.mrb[0].mxu0 %v767
      %v1139 = vpop.f32.mrb[0].mxu0
      %v1140 = vadd.f32 %v1100, %v1139
      %v1141 = vpop.f32.mrb[0].mxu0
      %v1142 = vpop.f32.mrb[0].mxu0
      %v1143 = vpop.f32.mrb[0].mxu0
      %1144 = vdwg.mxu0
      %1145 = vmatprep.subr.bf16.mxu0 0
      %1146 = vmatpush1.bf16.msra.mxu0 %v1001
      %1147 = vmatprep.subr.bf16.mxu0 0
      %1148 = vmatpush1.bf16.msra.mxu0 %v1002
      %1149 = vmatprep.subr.bf16.mxu0 0
      %1150 = vmatpush1.bf16.msra.mxu0 %v1003
      %1151 = vmatprep.subr.bf16.mxu0 0
      %1152 = vmatpush1.bf16.msra.mxu0 %v1004
      %1153 = vmatprep.subr.bf16.mxu0 0
      %1154 = vmatpush1.bf16.msra.mxu0 %v1005
      %1155 = vmatprep.subr.bf16.mxu0 0
      %1156 = vmatpush1.bf16.msra.mxu0 %v1006
      %1157 = vmatprep.subr.bf16.mxu0 0
      %1158 = vmatpush1.bf16.msra.mxu0 %v1007
      %1159 = vmatprep.subr.bf16.mxu0 0
      %1160 = vmatpush1.bf16.msra.mxu0 %v1008
      %1161 = vmatprep.subr.bf16.mxu0 0
      %1162 = vmatpush1.bf16.msra.mxu0 %v1009
      %1163 = vmatprep.subr.bf16.mxu0 0
      %1164 = vmatpush1.bf16.msra.mxu0 %v1010
      %1165 = vmatprep.subr.bf16.mxu0 0
      %1166 = vmatpush1.bf16.msra.mxu0 %v1011
      %1167 = vmatprep.subr.bf16.mxu0 0
      %1168 = vmatpush1.bf16.msra.mxu0 %v1012
      %1169 = vmatprep.subr.bf16.mxu0 0
      %1170 = vmatpush1.bf16.msra.mxu0 %v1013
      %1171 = vmatprep.subr.bf16.mxu0 0
      %1172 = vmatpush1.bf16.msra.mxu0 %v1014
      %1173 = vmatprep.subr.bf16.mxu0 0
      %1174 = vmatpush1.bf16.msra.mxu0 %v1015
      %1175 = vmatprep.subr.bf16.mxu0 0
      %1176 = vmatpush1.bf16.msra.mxu0 %v1016
      %1177 = vmatprep.mubr.bf16.mxu0 %v770
      %1178 = vmatmul.mubr.bf16.gmra.mrb[0].mxu0 %v769
      %v1179 = vpop.f32.mrb[0].mxu0
      %v1180 = vadd.f32 %v1140, %v1179
      %v1181 = vpop.f32.mrb[0].mxu0
      %v1182 = vpop.f32.mrb[0].mxu0
      %v1183 = vpop.f32.mrb[0].mxu0
      %1184 = vdwg.mxu0
      %v1185 = vld [vmem:[%s7] sm:$0xff]
      %vm1186 = vcmp.lt.s32.totalorder %v604, 2
      %v1187 = vlaneseq
      %v1188 = vand.u32 %v1187, 127
      %vm1189 = vcmp.lt.s32.totalorder %v1188, 53
      %v1190 = vsel %vm1189, %v649, -1e+30
      %1191 = vmax.xlane.f32.xlu0 %v1190
      %v1192 = vpop.xlane.xlu0 %1191
      %v1193 = vsub.f32 %v1190, %v1192
      %v1194 = vmul.f32 %v1193, 1.442695
      %v1195 = vpow.pop %v1194
      %1196 = vadd.xlane.f32.xlu0 %v1195
      %v1197 = vpop.xlane.xlu0 %1196
      %v1198 = vlog2.pop %v1197
      %v1199 = vmul.f32 %v1198, 0.6931472
      %v1200 = vadd.f32 %v1199, %v1192
      %1201 = vset.pattern.permute.xlu0 0
      %1202 = vperm.xlu0 %1201, %v1185
      %v1203 = vpop.permute.xlu0 %1202
      %vm1204 = vcmp.eq.s32.totalorder %v1188, %v1203
      %v1205 = vsel %vm1204, %v1190, 0.0
      %1206 = vadd.xlane.f32.xlu0 %v1205
      %v1207 = vpop.xlane.xlu0 %1206
      %v1208 = vsub.f32 %v1200, %v1207
      %v1209 = vsel %vm1186, %v1208, 0.0
      %v1210 = vrot.slane %v1209, 4
      %v1211 = vadd.f32 %v1209, %v1210
      %v1212 = vrot.slane %v1211, 2
      %v1213 = vadd.f32 %v1211, %v1212
      %v1214 = vrot.slane %v1213, 1
      %v1215 = vadd.f32 %v1213, %v1214
      %v1216 = vsel %vm1189, %v1180, -1e+30
      %1217 = vmax.xlane.f32.xlu0 %v1216
      %v1218 = vpop.xlane.xlu0 %1217
      %v1219 = vsub.f32 %v1216, %v1218
      %v1220 = vmul.f32 %v1219, 1.442695
      %v1221 = vpow.pop %v1220
      %1222 = vadd.xlane.f32.xlu0 %v1221
      %v1223 = vpop.xlane.xlu0 %1222
      %v1224 = vlog2.pop %v1223
      %v1225 = vmul.f32 %v1224, 0.6931472
      %v1226 = vadd.f32 %v1225, %v1218
      %v1227 = vsel %vm1204, %v1216, 0.0
      %1228 = vadd.xlane.f32.xlu0 %v1227
      %v1229 = vpop.xlane.xlu0 %1228
      %v1230 = vsub.f32 %v1226, %v1229
      %v1231 = vsel %vm1186, %v1230, 0.0
      %v1232 = vrot.slane %v1231, 4
      %v1233 = vadd.f32 %v1231, %v1232
      %v1234 = vrot.slane %v1233, 2
      %v1235 = vadd.f32 %v1233, %v1234
      %v1236 = vrot.slane %v1235, 1
      %v1237 = vadd.f32 %v1235, %v1236
      %v1238 = vadd.f32 %v1215, %v1237
      %v1239 = vmul.f32 %v1238, 0.5
      %vm1240 = vcmask 0
      %1241 = vst.msk [vmem:[#allocation11] sm:$0x1] %vm1240, %v1239
    $region41: #{model_forward.1} parent=1 // pred_fallthru
      _
    // Predicated region
    $region49: #{model_forward.1} parent=1 // pred_check
      _
    $region50: #{model_forward.1} parent=1 // pred_check_branch
      %1243 = sbr.rel (0) target = $region52
    $region51: #{model_forward.1} parent=1 // pred_region
      %s1245 = ssub.s32 16, 16
      %1246 = vsyncadd [#allocation8], %s1245
      %s1248 = sshll.u32 [#allocation11], 4
      %s1249 = int_to_ptr.vmem [resolvable:$true] %s1248
      %1251 = dma.vmem_to_hbm [thread:$0]  %s1249, 16, %s8, [#allocation8]
    $region52: #{model_forward.1} parent=1 // pred_fallthru
      _
    // Predicated region
    $region53: #{model_forward.1} parent=1 // pred_check
      _
    $region54: #{model_forward.1} parent=1 // pred_check_branch
      %1253 = sbr.rel (0) target = $region56
    $region55: #{model_forward.1} parent=1 // pred_region
      %1254 = dma.done [#allocation8], 16
    $region56: #{model_forward.1} parent=1 // pred_fallthru
      _
    %1255 = vsyncpa [#allocation7], 1
    %1256 = vsyncpa [#allocation10], 1
    %1257 = vsyncpa [#allocation8], 1

</llo_original>
